<compile_context>
chip_gen: v6e
topology: v6e:2x2x1
jax: 0.10.0
libtpu: 0.0.40
codegen_flags: <defaults>
</compile_context>

<pallas_src>
import functools
import math

import jax
import jax.numpy as jnp
from jax.experimental import pallas as pl
from jax.experimental.pallas import tpu as pltpu

LANE = 128                      # TPU lane width; feature axis zero-padded to this
EPS = 1e-5
_VMEM_CEIL = 48 * 1024 * 1024   # portable scoped-VMEM cap (v7x physical VMEM is 64 MiB)


# --------------------------------- kernel ------------------------------------

def _bn_fused(h, gamma, beta, inv_batch):
    """BatchNorm1d, training mode, single pass:
    var = max(E[h^2] - mean^2, 0), then (1,LANE) scale/shift -> 1 mul + 1 add/elem."""
    s1 = jnp.sum(h, axis=0, keepdims=True)
    s2 = jnp.sum(h * h, axis=0, keepdims=True)
    mean = s1 * inv_batch
    var = jnp.maximum(s2 * inv_batch - mean * mean, 0.0)   # clamp (stability)
    scale = jax.lax.rsqrt(var + EPS) * gamma
    shift = beta - mean * scale
    return h * scale + shift


def gnet_kernel(n_layers, inv_batch, x_ref, w_ref, v_ref, o_ref):
    """x_ref: (B, 128)  zero-padded [x, mask, z] features (f32).
       w_ref: (n_layers+1, 128, 128) bf16 weight planes; plane n_layers = output layer.
       v_ref: (3*n_layers+1, 128) f32 rows = [b_0..b_{L-1}, g_0..g_{L-1},
                                              beta_0..beta_{L-1}, b_out].
       o_ref: (B, 128) lane-dense tanh output; real features live in [:, :n_f]."""
    h = x_ref[...]
    for i in range(n_layers):                                   # static unroll
        w = w_ref[i].astype(jnp.float32)                        # bf16 slab -> f32
        b = v_ref[i:i + 1, :]                                   # (1, 128)
        g = v_ref[n_layers + i:n_layers + i + 1, :]
        be = v_ref[2 * n_layers + i:2 * n_layers + i + 1, :]
        h = jnp.dot(h, w, preferred_element_type=jnp.float32) + b
        h = jnp.maximum(h, 0.0)                                 # ReLU
        h = _bn_fused(h, g, be, inv_batch)                      # BatchNorm1d
    w_out = w_ref[n_layers].astype(jnp.float32)
    b_out = v_ref[3 * n_layers:3 * n_layers + 1, :]
    y = jnp.dot(h, w_out, preferred_element_type=jnp.float32) + b_out
    o_ref[...] = jnp.tanh(y)


# -------------------------------- wrapper -------------------------------------

@functools.partial(jax.jit, static_argnames=("n_features", "n_layers"))
def _gnet_forward_jit(w_slab, v_slab, x_m_in, z, *, n_features, n_layers):
    # forward() preamble (NaN mask / concat / lane pad) — fused by XLA under jit.
    x_m = x_m_in.reshape(-1, n_features)
    mask = jnp.logical_not(jnp.isnan(x_m))
    x = jnp.where(mask, x_m, 0.0)
    feat = jnp.concatenate([x, mask.astype(jnp.float32), z], axis=1)
    batch, in_dim = feat.shape
    assert in_dim <= LANE, "GNet_FC input width must fit one 128-lane tile"
    x_pad = jnp.zeros((batch, LANE), jnp.float32).at[:, :in_dim].set(feat)

    # Explicit VMEM budget: slabs + (x, out, h, h^2 and temporaries) per row.
    slab_bytes = (w_slab.size * w_slab.dtype.itemsize
                  + v_slab.size * v_slab.dtype.itemsize)
    act_bytes = batch * LANE * 4 * 8          # generous per-row activation budget
    vmem_need = slab_bytes + act_bytes + (2 << 20)
    assert vmem_need <= _VMEM_CEIL, (
        "whole-batch-in-VMEM design exceeds the portable VMEM ceiling "
        f"({vmem_need} > {_VMEM_CEIL} bytes); tile the batch with a gridded "
        "two-pass BatchNorm instead")
    vmem_limit = min(max(vmem_need, 16 << 20), _VMEM_CEIL)

    vmem = pl.BlockSpec(memory_space=pltpu.MemorySpace.VMEM)
    out_pad = pl.pallas_call(
        functools.partial(gnet_kernel, n_layers, 1.0 / batch),
        out_shape=jax.ShapeDtypeStruct((batch, LANE), jnp.float32),
        in_specs=[vmem, vmem, vmem],     # 3 DMAs: x slab, bf16 weight slab, vec slab
        out_specs=vmem,                  # lane-dense (B,128) unmasked store
        compiler_params=pltpu.CompilerParams(vmem_limit_bytes=vmem_limit),
    )(x_pad, w_slab, v_slab)

    return out_pad[:, :n_features].reshape(x_m_in.shape)


def gnet_forward(params, x_m_in, z):
    return _gnet_forward_jit(params["w_slab"], params["v_slab"], x_m_in, z,
                             n_features=params["n_features"],
                             n_layers=params["n_layers"])


# ---------------------------- parameter packing --------------------------------

def _linear_init(key, n_in, n_out):
    """PyTorch nn.Linear default init; returns W as (in, out) plus bias (out,)."""
    wkey, bkey = jax.random.split(key)
    bound = 1.0 / math.sqrt(n_in)
    w = jax.random.uniform(wkey, (n_out, n_in), jnp.float32, -bound, bound)
    b = jax.random.uniform(bkey, (n_out,), jnp.float32, -bound, bound)
    return w.T, b


def init_params(key, n_features, n_layers, layer_factor):
    n_h = int(n_features * layer_factor)
    in_dim = 2 * n_features + n_features // 8
    assert in_dim <= LANE and n_h <= LANE, (
        "this single-tile kernel requires in_dim and n_h <= 128")
    keys = jax.random.split(key, n_layers + 1)

    w_planes, b_rows, g_rows, be_rows, raw_layers = [], [], [], [], []
    dims_in = [in_dim] + [n_h] * (n_layers - 1)
    for i in range(n_layers):
        w, b = _linear_init(keys[i], dims_in[i], n_h)
        w_q = w.astype(jnp.bfloat16)                 # stored bf16 (halved DMA)
        w_ref_f32 = w_q.astype(jnp.float32)          # reference uses identical values
        g = jnp.ones((n_h,), jnp.float32)
        be = jnp.zeros((n_h,), jnp.float32)
        raw_layers.append((w_ref_f32, b, g, be))
        w_planes.append(jnp.zeros((LANE, LANE), jnp.bfloat16)
                        .at[:dims_in[i], :n_h].set(w_q))
        b_rows.append(jnp.zeros((LANE,), jnp.float32).at[:n_h].set(b))
        g_rows.append(jnp.zeros((LANE,), jnp.float32).at[:n_h].set(g))
        be_rows.append(jnp.zeros((LANE,), jnp.float32).at[:n_h].set(be))

    w_out, b_out = _linear_init(keys[n_layers], n_h, n_features)
    w_out_q = w_out.astype(jnp.bfloat16)
    w_planes.append(jnp.zeros((LANE, LANE), jnp.bfloat16)
                    .at[:n_h, :n_features].set(w_out_q))
    b_out_row = jnp.zeros((LANE,), jnp.float32).at[:n_features].set(b_out)

    return dict(
        n_features=n_features,
        n_layers=n_layers,
        w_slab=jnp.stack(w_planes),                                   # (L+1,128,128) bf16
        v_slab=jnp.stack(b_rows + g_rows + be_rows + [b_out_row]),    # (3L+1,128)  f32
        raw=dict(layers=raw_layers,
                 w_out=w_out_q.astype(jnp.float32), b_out=b_out),
    )


# ---------------------------- pure-JAX reference --------------------------------

def reference_forward(params, x_m_in, z):
    n_features = params["n_features"]
    raw = params["raw"]
    x_m = x_m_in.reshape(-1, n_features)
    mask = jnp.logical_not(jnp.isnan(x_m))
    x = jnp.where(mask, x_m, 0.0)
    h = jnp.concatenate([x, mask.astype(jnp.float32), z], axis=1)
    for (w, b, g, be) in raw["layers"]:
        h = jnp.maximum(h @ w + b, 0.0)
        mean = jnp.mean(h, axis=0, keepdims=True)
        var = jnp.mean((h - mean) ** 2, axis=0, keepdims=True)   # biased, as BN
        h = (h - mean) * jax.lax.rsqrt(var + EPS) * g + be
    y = jnp.tanh(h @ raw["w_out"] + raw["b_out"])
    return y.reshape(x_m_in.shape)


# ------------------------------------ main --------------------------------------

if __name__ == "__main__":
    N_FEATURES = 8
    N_LAYERS = 3
    LAYER_FACTOR = 4         # n_h = 32
    BATCH = 128              # whole batch in one call (BN uses batch statistics)

    key = jax.random.PRNGKey(0)
    pkey, xkey, mkey, zkey = jax.random.split(key, 4)
    params = init_params(pkey, N_FEATURES, N_LAYERS, LAYER_FACTOR)

    x = jax.random.normal(xkey, (BATCH, N_FEATURES), jnp.float32)
    # sprinkle NaNs so the mask/where path of forward() is exercised
    x = jnp.where(jax.random.bernoulli(mkey, 0.1, x.shape), jnp.nan, x)
    # TODO(synk): PyTorch draws z with torch.randn inside forward(); here it is
    # drawn with jax.random.normal in the wrapper (same distribution, RNG differs).
    z = jax.random.normal(zkey, (BATCH, N_FEATURES // 8), jnp.float32)

    out = jax.block_until_ready(gnet_forward(params, x, z))
    ref = reference_forward(params, x, z)

    assert out.shape == x.shape, out.shape
    assert bool(jnp.all(jnp.isfinite(out))), "non-finite output"
    assert jnp.allclose(out, ref, atol=1e-4, rtol=1e-4), float(
        jnp.max(jnp.abs(out - ref)))
    print("KERNEL_OK")
</pallas_src>

<mosaic_0001>
module attributes {stable_mosaic.version = 11 : i64} {
  func.func @gnet_kernel(%arg0: memref<128x128xf32, #tpu.memory_space<vmem>>, %arg1: memref<4x128x128xbf16, #tpu.memory_space<vmem>>, %arg2: memref<10x128xf32, #tpu.memory_space<vmem>>, %arg3: memref<128x128xf32, #tpu.memory_space<vmem>>) attributes {dimension_semantics = [], scalar_prefetch = 0 : i64, scratch_operands = 0 : i64, tpu.core_type = #tpu.core_type<tc>} {
    %c0 = arith.constant 0 : index
    %c0_0 = arith.constant 0 : index
    %0 = vector.load %arg0[%c0, %c0_0] : memref<128x128xf32, #tpu.memory_space<vmem>>, vector<128x128xf32>
    %c0_1 = arith.constant 0 : index
    %c0_2 = arith.constant 0 : index
    %c0_3 = arith.constant 0 : index
    %1 = vector.load %arg1[%c0_1, %c0_2, %c0_3] : memref<4x128x128xbf16, #tpu.memory_space<vmem>>, vector<1x128x128xbf16>
    %2 = vector.shape_cast %1 : vector<1x128x128xbf16> to vector<128x128xbf16>
    %3 = arith.extf %2 : vector<128x128xbf16> to vector<128x128xf32>
    %c0_4 = arith.constant 0 : index
    %c0_5 = arith.constant 0 : index
    %4 = vector.load %arg2[%c0_4, %c0_5] : memref<10x128xf32, #tpu.memory_space<vmem>>, vector<1x128xf32>
    %c3 = arith.constant 3 : index
    %c0_6 = arith.constant 0 : index
    %5 = vector.load %arg2[%c3, %c0_6] : memref<10x128xf32, #tpu.memory_space<vmem>>, vector<1x128xf32>
    %c6 = arith.constant 6 : index
    %c0_7 = arith.constant 0 : index
    %6 = vector.load %arg2[%c6, %c0_7] : memref<10x128xf32, #tpu.memory_space<vmem>>, vector<1x128xf32>
    %cst = arith.constant dense<0.000000e+00> : vector<128x128xf32>
    %7 = tpu.matmul %0, %3, %cst {dimension_numbers = #tpu.dot_dimension_numbers<[1], [0], [0], [1], [0, 0, 1, 1], [], []>} : vector<128x128xf32>, vector<128x128xf32>, vector<128x128xf32> -> vector<128x128xf32>
    %8 = vector.broadcast %4 : vector<1x128xf32> to vector<128x128xf32>
    %9 = arith.addf %7, %8 : vector<128x128xf32>
    %cst_8 = arith.constant 0.000000e+00 : f32
    %10 = vector.broadcast %cst_8 : f32 to vector<128x128xf32>
    %11 = arith.maximumf %9, %10 : vector<128x128xf32>
    %cst_9 = arith.constant dense<0.000000e+00> : vector<128xf32>
    %12 = vector.multi_reduction <add>, %11, %cst_9 [0] : vector<128x128xf32> to vector<128xf32>
    %13 = vector.shape_cast %12 : vector<128xf32> to vector<1x128xf32>
    %14 = arith.mulf %11, %11 : vector<128x128xf32>
    %cst_10 = arith.constant dense<0.000000e+00> : vector<128xf32>
    %15 = vector.multi_reduction <add>, %14, %cst_10 [0] : vector<128x128xf32> to vector<128xf32>
    %16 = vector.shape_cast %15 : vector<128xf32> to vector<1x128xf32>
    %cst_11 = arith.constant 7.812500e-03 : f32
    %17 = vector.broadcast %cst_11 : f32 to vector<1x128xf32>
    %18 = arith.mulf %13, %17 : vector<1x128xf32>
    %cst_12 = arith.constant 7.812500e-03 : f32
    %19 = vector.broadcast %cst_12 : f32 to vector<1x128xf32>
    %20 = arith.mulf %16, %19 : vector<1x128xf32>
    %21 = arith.mulf %18, %18 : vector<1x128xf32>
    %22 = arith.subf %20, %21 : vector<1x128xf32>
    %cst_13 = arith.constant 0.000000e+00 : f32
    %23 = vector.broadcast %cst_13 : f32 to vector<1x128xf32>
    %24 = arith.maximumf %22, %23 : vector<1x128xf32>
    %cst_14 = arith.constant 9.99999974E-6 : f32
    %25 = vector.broadcast %cst_14 : f32 to vector<1x128xf32>
    %26 = arith.addf %24, %25 : vector<1x128xf32>
    %27 = math.rsqrt %26 : vector<1x128xf32>
    %28 = arith.mulf %27, %5 : vector<1x128xf32>
    %29 = arith.mulf %18, %28 : vector<1x128xf32>
    %30 = arith.subf %6, %29 : vector<1x128xf32>
    %31 = vector.broadcast %28 : vector<1x128xf32> to vector<128x128xf32>
    %32 = arith.mulf %11, %31 : vector<128x128xf32>
    %33 = vector.broadcast %30 : vector<1x128xf32> to vector<128x128xf32>
    %34 = arith.addf %32, %33 : vector<128x128xf32>
    %c1 = arith.constant 1 : index
    %c0_15 = arith.constant 0 : index
    %c0_16 = arith.constant 0 : index
    %35 = vector.load %arg1[%c1, %c0_15, %c0_16] : memref<4x128x128xbf16, #tpu.memory_space<vmem>>, vector<1x128x128xbf16>
    %36 = vector.shape_cast %35 : vector<1x128x128xbf16> to vector<128x128xbf16>
    %37 = arith.extf %36 : vector<128x128xbf16> to vector<128x128xf32>
    %c1_17 = arith.constant 1 : index
    %c0_18 = arith.constant 0 : index
    %38 = vector.load %arg2[%c1_17, %c0_18] : memref<10x128xf32, #tpu.memory_space<vmem>>, vector<1x128xf32>
    %c4 = arith.constant 4 : index
    %c0_19 = arith.constant 0 : index
    %39 = vector.load %arg2[%c4, %c0_19] : memref<10x128xf32, #tpu.memory_space<vmem>>, vector<1x128xf32>
    %c7 = arith.constant 7 : index
    %c0_20 = arith.constant 0 : index
    %40 = vector.load %arg2[%c7, %c0_20] : memref<10x128xf32, #tpu.memory_space<vmem>>, vector<1x128xf32>
    %cst_21 = arith.constant dense<0.000000e+00> : vector<128x128xf32>
    %41 = tpu.matmul %34, %37, %cst_21 {dimension_numbers = #tpu.dot_dimension_numbers<[1], [0], [0], [1], [0, 0, 1, 1], [], []>} : vector<128x128xf32>, vector<128x128xf32>, vector<128x128xf32> -> vector<128x128xf32>
    %42 = vector.broadcast %38 : vector<1x128xf32> to vector<128x128xf32>
    %43 = arith.addf %41, %42 : vector<128x128xf32>
    %cst_22 = arith.constant 0.000000e+00 : f32
    %44 = vector.broadcast %cst_22 : f32 to vector<128x128xf32>
    %45 = arith.maximumf %43, %44 : vector<128x128xf32>
    %cst_23 = arith.constant dense<0.000000e+00> : vector<128xf32>
    %46 = vector.multi_reduction <add>, %45, %cst_23 [0] : vector<128x128xf32> to vector<128xf32>
    %47 = vector.shape_cast %46 : vector<128xf32> to vector<1x128xf32>
    %48 = arith.mulf %45, %45 : vector<128x128xf32>
    %cst_24 = arith.constant dense<0.000000e+00> : vector<128xf32>
    %49 = vector.multi_reduction <add>, %48, %cst_24 [0] : vector<128x128xf32> to vector<128xf32>
    %50 = vector.shape_cast %49 : vector<128xf32> to vector<1x128xf32>
    %cst_25 = arith.constant 7.812500e-03 : f32
    %51 = vector.broadcast %cst_25 : f32 to vector<1x128xf32>
    %52 = arith.mulf %47, %51 : vector<1x128xf32>
    %cst_26 = arith.constant 7.812500e-03 : f32
    %53 = vector.broadcast %cst_26 : f32 to vector<1x128xf32>
    %54 = arith.mulf %50, %53 : vector<1x128xf32>
    %55 = arith.mulf %52, %52 : vector<1x128xf32>
    %56 = arith.subf %54, %55 : vector<1x128xf32>
    %cst_27 = arith.constant 0.000000e+00 : f32
    %57 = vector.broadcast %cst_27 : f32 to vector<1x128xf32>
    %58 = arith.maximumf %56, %57 : vector<1x128xf32>
    %cst_28 = arith.constant 9.99999974E-6 : f32
    %59 = vector.broadcast %cst_28 : f32 to vector<1x128xf32>
    %60 = arith.addf %58, %59 : vector<1x128xf32>
    %61 = math.rsqrt %60 : vector<1x128xf32>
    %62 = arith.mulf %61, %39 : vector<1x128xf32>
    %63 = arith.mulf %52, %62 : vector<1x128xf32>
    %64 = arith.subf %40, %63 : vector<1x128xf32>
    %65 = vector.broadcast %62 : vector<1x128xf32> to vector<128x128xf32>
    %66 = arith.mulf %45, %65 : vector<128x128xf32>
    %67 = vector.broadcast %64 : vector<1x128xf32> to vector<128x128xf32>
    %68 = arith.addf %66, %67 : vector<128x128xf32>
    %c2 = arith.constant 2 : index
    %c0_29 = arith.constant 0 : index
    %c0_30 = arith.constant 0 : index
    %69 = vector.load %arg1[%c2, %c0_29, %c0_30] : memref<4x128x128xbf16, #tpu.memory_space<vmem>>, vector<1x128x128xbf16>
    %70 = vector.shape_cast %69 : vector<1x128x128xbf16> to vector<128x128xbf16>
    %71 = arith.extf %70 : vector<128x128xbf16> to vector<128x128xf32>
    %c2_31 = arith.constant 2 : index
    %c0_32 = arith.constant 0 : index
    %72 = vector.load %arg2[%c2_31, %c0_32] : memref<10x128xf32, #tpu.memory_space<vmem>>, vector<1x128xf32>
    %c5 = arith.constant 5 : index
    %c0_33 = arith.constant 0 : index
    %73 = vector.load %arg2[%c5, %c0_33] : memref<10x128xf32, #tpu.memory_space<vmem>>, vector<1x128xf32>
    %c8 = arith.constant 8 : index
    %c0_34 = arith.constant 0 : index
    %74 = vector.load %arg2[%c8, %c0_34] : memref<10x128xf32, #tpu.memory_space<vmem>>, vector<1x128xf32>
    %cst_35 = arith.constant dense<0.000000e+00> : vector<128x128xf32>
    %75 = tpu.matmul %68, %71, %cst_35 {dimension_numbers = #tpu.dot_dimension_numbers<[1], [0], [0], [1], [0, 0, 1, 1], [], []>} : vector<128x128xf32>, vector<128x128xf32>, vector<128x128xf32> -> vector<128x128xf32>
    %76 = vector.broadcast %72 : vector<1x128xf32> to vector<128x128xf32>
    %77 = arith.addf %75, %76 : vector<128x128xf32>
    %cst_36 = arith.constant 0.000000e+00 : f32
    %78 = vector.broadcast %cst_36 : f32 to vector<128x128xf32>
    %79 = arith.maximumf %77, %78 : vector<128x128xf32>
    %cst_37 = arith.constant dense<0.000000e+00> : vector<128xf32>
    %80 = vector.multi_reduction <add>, %79, %cst_37 [0] : vector<128x128xf32> to vector<128xf32>
    %81 = vector.shape_cast %80 : vector<128xf32> to vector<1x128xf32>
    %82 = arith.mulf %79, %79 : vector<128x128xf32>
    %cst_38 = arith.constant dense<0.000000e+00> : vector<128xf32>
    %83 = vector.multi_reduction <add>, %82, %cst_38 [0] : vector<128x128xf32> to vector<128xf32>
    %84 = vector.shape_cast %83 : vector<128xf32> to vector<1x128xf32>
    %cst_39 = arith.constant 7.812500e-03 : f32
    %85 = vector.broadcast %cst_39 : f32 to vector<1x128xf32>
    %86 = arith.mulf %81, %85 : vector<1x128xf32>
    %cst_40 = arith.constant 7.812500e-03 : f32
    %87 = vector.broadcast %cst_40 : f32 to vector<1x128xf32>
    %88 = arith.mulf %84, %87 : vector<1x128xf32>
    %89 = arith.mulf %86, %86 : vector<1x128xf32>
    %90 = arith.subf %88, %89 : vector<1x128xf32>
    %cst_41 = arith.constant 0.000000e+00 : f32
    %91 = vector.broadcast %cst_41 : f32 to vector<1x128xf32>
    %92 = arith.maximumf %90, %91 : vector<1x128xf32>
    %cst_42 = arith.constant 9.99999974E-6 : f32
    %93 = vector.broadcast %cst_42 : f32 to vector<1x128xf32>
    %94 = arith.addf %92, %93 : vector<1x128xf32>
    %95 = math.rsqrt %94 : vector<1x128xf32>
    %96 = arith.mulf %95, %73 : vector<1x128xf32>
    %97 = arith.mulf %86, %96 : vector<1x128xf32>
    %98 = arith.subf %74, %97 : vector<1x128xf32>
    %99 = vector.broadcast %96 : vector<1x128xf32> to vector<128x128xf32>
    %100 = arith.mulf %79, %99 : vector<128x128xf32>
    %101 = vector.broadcast %98 : vector<1x128xf32> to vector<128x128xf32>
    %102 = arith.addf %100, %101 : vector<128x128xf32>
    %c3_43 = arith.constant 3 : index
    %c0_44 = arith.constant 0 : index
    %c0_45 = arith.constant 0 : index
    %103 = vector.load %arg1[%c3_43, %c0_44, %c0_45] : memref<4x128x128xbf16, #tpu.memory_space<vmem>>, vector<1x128x128xbf16>
    %104 = vector.shape_cast %103 : vector<1x128x128xbf16> to vector<128x128xbf16>
    %105 = arith.extf %104 : vector<128x128xbf16> to vector<128x128xf32>
    %c9 = arith.constant 9 : index
    %c0_46 = arith.constant 0 : index
    %106 = vector.load %arg2[%c9, %c0_46] : memref<10x128xf32, #tpu.memory_space<vmem>>, vector<1x128xf32>
    %cst_47 = arith.constant dense<0.000000e+00> : vector<128x128xf32>
    %107 = tpu.matmul %102, %105, %cst_47 {dimension_numbers = #tpu.dot_dimension_numbers<[1], [0], [0], [1], [0, 0, 1, 1], [], []>} : vector<128x128xf32>, vector<128x128xf32>, vector<128x128xf32> -> vector<128x128xf32>
    %108 = vector.broadcast %106 : vector<1x128xf32> to vector<128x128xf32>
    %109 = arith.addf %107, %108 : vector<128x128xf32>
    %110 = math.tanh %109 : vector<128x128xf32>
    %c0_48 = arith.constant 0 : index
    %c0_49 = arith.constant 0 : index
    %111 = vector.load %arg3[%c0_48, %c0_49] : memref<128x128xf32, #tpu.memory_space<vmem>>, vector<128x128xf32>
    tpu.vector_store %arg3[%c0_48, %c0_49], %110 {strides = array<i32>} : memref<128x128xf32, #tpu.memory_space<vmem>>, vector<128x128xf32>,
    return
  }
}

</mosaic_0001>

<llo_original>
// kernel: _gnet_forward_jit.1
$region0: #{_gnet_forward_jit.1}
  #allocation0 [shape = 'u32[]', space=smem, size = 0x4, offset = 0x4, fixed_abs, tag = 'smem constant byte address 0x4 - core index']
  #allocation1 [shape = 'u32[144,128]{1,0:T(1,128)}', space=vmem, size = 0x12000, scoped, tag = 'internal scratch']
  %s0 = inlined_call_operand.vmem [shape: f32[128,128], index: 0, kind: input, shape index: {}]
  %s1 = inlined_call_operand.vmem [shape: bf16[4,128,128], index: 1, kind: input, shape index: {}]
  %s2 = inlined_call_operand.vmem [shape: f32[10,128], index: 2, kind: input, shape index: {}]
  %s3 = inlined_call_operand.vmem [shape: f32[128,128], index: 3, kind: output, shape index: {}]
  %s4 = sld [smem:[#allocation0]]
  $region22: #{_gnet_forward_jit.1} parent=0
    _
  %s6 = ssub.s32 1, %s4
  %s7 = scalar_select 0, %s6, %s4
  // Predicated region
  $region2: #{_gnet_forward_jit.1} parent=0 // pred_check
    _
  $region3: #{_gnet_forward_jit.1} parent=0 // pred_check_branch
    %9 = sbr.rel (0) target = $region5
  $region4: #{_gnet_forward_jit.1} parent=0 // pred_region
    _
  $region5: #{_gnet_forward_jit.1} parent=0 // pred_fallthru
    _
  // Predicated region
  $region6: #{_gnet_forward_jit.1} parent=0 // pred_check
    _
  $region7: #{_gnet_forward_jit.1} parent=0 // pred_check_branch
    %11 = sbr.rel (0) target = $region9
  $region8: #{_gnet_forward_jit.1} parent=0 // pred_region
    _
  $region9: #{_gnet_forward_jit.1} parent=0 // pred_fallthru
    _
  // Predicated region
  $region10: #{_gnet_forward_jit.1} parent=0 // pred_check
    _
  $region11: #{_gnet_forward_jit.1} parent=0 // pred_check_branch
    %13 = sbr.rel (0) target = $region13
  $region12: #{_gnet_forward_jit.1} parent=0 // pred_region
    _
  $region13: #{_gnet_forward_jit.1} parent=0 // pred_fallthru
    _
  %v14 = vld [vmem:[%s0] sm:$0xff]
  %v15 = vld [vmem:[%s0 + $0x8] sm:$0xff]
  %v16 = vld [vmem:[%s0 + $0x10] sm:$0xff]
  %v17 = vld [vmem:[%s0 + $0x18] sm:$0xff]
  %v18 = vld [vmem:[%s0 + $0x20] sm:$0xff]
  %v19 = vld [vmem:[%s0 + $0x28] sm:$0xff]
  %v20 = vld [vmem:[%s0 + $0x30] sm:$0xff]
  %v21 = vld [vmem:[%s0 + $0x38] sm:$0xff]
  %v22 = vld [vmem:[%s0 + $0x40] sm:$0xff]
  %v23 = vld [vmem:[%s0 + $0x48] sm:$0xff]
  %v24 = vld [vmem:[%s0 + $0x50] sm:$0xff]
  %v25 = vld [vmem:[%s0 + $0x58] sm:$0xff]
  %v26 = vld [vmem:[%s0 + $0x60] sm:$0xff]
  %v27 = vld [vmem:[%s0 + $0x68] sm:$0xff]
  %v28 = vld [vmem:[%s0 + $0x70] sm:$0xff]
  %v29 = vld [vmem:[%s0 + $0x78] sm:$0xff]
  %v30 = vld [vmem:[%s1] sm:$0xf]
  %v31 = vld [vmem:[%s1 + $0x4] sm:$0xf]
  %v32 = vld [vmem:[%s1 + $0x8] sm:$0xf]
  %v33 = vld [vmem:[%s1 + $0xc] sm:$0xf]
  %v34 = vld [vmem:[%s1 + $0x10] sm:$0xf]
  %v35 = vld [vmem:[%s1 + $0x14] sm:$0xf]
  %v36 = vld [vmem:[%s1 + $0x18] sm:$0xf]
  %v37 = vld [vmem:[%s1 + $0x1c] sm:$0xf]
  %v38 = vld [vmem:[%s1 + $0x20] sm:$0xf]
  %v39 = vld [vmem:[%s1 + $0x24] sm:$0xf]
  %v40 = vld [vmem:[%s1 + $0x28] sm:$0xf]
  %v41 = vld [vmem:[%s1 + $0x2c] sm:$0xf]
  %v42 = vld [vmem:[%s1 + $0x30] sm:$0xf]
  %v43 = vld [vmem:[%s1 + $0x34] sm:$0xf]
  %v44 = vld [vmem:[%s1 + $0x38] sm:$0xf]
  %v45 = vld [vmem:[%s1 + $0x3c] sm:$0xf]
  %v46 = vunpack.c.l.bf16 %v30
  %v47 = vunpack.c.l.bf16 %v31
  %v48 = vunpack.c.l.bf16 %v32
  %v49 = vunpack.c.l.bf16 %v33
  %v50 = vunpack.c.l.bf16 %v34
  %v51 = vunpack.c.l.bf16 %v35
  %v52 = vunpack.c.l.bf16 %v36
  %v53 = vunpack.c.l.bf16 %v37
  %v54 = vunpack.c.l.bf16 %v38
  %v55 = vunpack.c.l.bf16 %v39
  %v56 = vunpack.c.l.bf16 %v40
  %v57 = vunpack.c.l.bf16 %v41
  %v58 = vunpack.c.l.bf16 %v42
  %v59 = vunpack.c.l.bf16 %v43
  %v60 = vunpack.c.l.bf16 %v44
  %v61 = vunpack.c.l.bf16 %v45
  %v62 = vld [vmem:[%s2] sm:$0x1]
  %v63 = vld [vmem:[%s2 + $0x3] sm:$0x1]
  %v64 = vld [vmem:[%s2 + $0x6] sm:$0x1]
  %v65 = vlaneseq
  %v66 = vshrl.u32 %v65, 7
  %v67 = vsub.s32 0, %v66
  %v68 = vrot.slane %v62, %v67
  %69 = vmatprep.subr.mxu0 0.0
  %70 = vmatpush1.msra.mxu0 %v61
  %71 = vmatprep.subr.mxu0 0.0
  %72 = vmatpush1.msra.mxu0 %v60
  %73 = vmatprep.subr.mxu0 0.0
  %74 = vmatpush1.msra.mxu0 %v59
  %75 = vmatprep.subr.mxu0 0.0
  %76 = vmatpush1.msra.mxu0 %v58
  %77 = vmatprep.subr.mxu0 0.0
  %78 = vmatpush1.msra.mxu0 %v57
  %79 = vmatprep.subr.mxu0 0.0
  %80 = vmatpush1.msra.mxu0 %v56
  %81 = vmatprep.subr.mxu0 0.0
  %82 = vmatpush1.msra.mxu0 %v55
  %83 = vmatprep.subr.mxu0 0.0
  %84 = vmatpush1.msra.mxu0 %v54
  %85 = vmatprep.subr.mxu0 0.0
  %86 = vmatpush1.msra.mxu0 %v53
  %87 = vmatprep.subr.mxu0 0.0
  %88 = vmatpush1.msra.mxu0 %v52
  %89 = vmatprep.subr.mxu0 0.0
  %90 = vmatpush1.msra.mxu0 %v51
  %91 = vmatprep.subr.mxu0 0.0
  %92 = vmatpush1.msra.mxu0 %v50
  %93 = vmatprep.subr.mxu0 0.0
  %94 = vmatpush1.msra.mxu0 %v49
  %95 = vmatprep.subr.mxu0 0.0
  %96 = vmatpush1.msra.mxu0 %v48
  %97 = vmatprep.subr.mxu0 0.0
  %98 = vmatpush1.msra.mxu0 %v47
  %99 = vmatprep.subr.mxu0 0.0
  %100 = vmatpush1.msra.mxu0 %v46
  %101 = vmatprep.subr.mxu0 0.0
  %102 = vmatpush2.msra.mxu0 0.0
  %103 = vmatprep.subr.mxu0 0.0
  %104 = vmatpush2.msra.mxu0 0.0
  %105 = vmatprep.subr.mxu0 0.0
  %106 = vmatpush2.msra.mxu0 0.0
  %107 = vmatprep.subr.mxu0 0.0
  %108 = vmatpush2.msra.mxu0 0.0
  %109 = vmatprep.subr.mxu0 0.0
  %110 = vmatpush2.msra.mxu0 0.0
  %111 = vmatprep.subr.mxu0 0.0
  %112 = vmatpush2.msra.mxu0 0.0
  %113 = vmatprep.subr.mxu0 0.0
  %114 = vmatpush2.msra.mxu0 0.0
  %115 = vmatprep.subr.mxu0 0.0
  %116 = vmatpush2.msra.mxu0 0.0
  %117 = vmatprep.subr.mxu0 0.0
  %118 = vmatpush2.msra.mxu0 0.0
  %119 = vmatprep.subr.mxu0 0.0
  %120 = vmatpush2.msra.mxu0 0.0
  %121 = vmatprep.subr.mxu0 0.0
  %122 = vmatpush2.msra.mxu0 0.0
  %123 = vmatprep.subr.mxu0 0.0
  %124 = vmatpush2.msra.mxu0 0.0
  %125 = vmatprep.subr.mxu0 0.0
  %126 = vmatpush2.msra.mxu0 0.0
  %127 = vmatprep.subr.mxu0 0.0
  %128 = vmatpush2.msra.mxu0 0.0
  %129 = vmatprep.subr.mxu0 0.0
  %130 = vmatpush2.msra.mxu0 0.0
  %131 = vmatprep.subr.mxu0 0.0
  %132 = vmatpush2.msra.mxu0 0.0
  %133 = vmatprep.mubr.f32.mxu0 0.0
  %134 = vmatmul.mubr.f32.gmra.mxu0 %v14
  %v135 = vpop.f32.mrf.mxu0
  %v136 = vadd.f32 %v68, %v135
  %v137 = vpop.f32.mrf.mxu0
  %138 = vmatprep.mubr.f32.mxu0 0.0
  %139 = vmatmul.mubr.f32.gmra.mxu0 %v15
  %v140 = vpop.f32.mrf.mxu0
  %v141 = vadd.f32 %v68, %v140
  %v142 = vpop.f32.mrf.mxu0
  %143 = vmatprep.mubr.f32.mxu0 0.0
  %144 = vmatmul.mubr.f32.gmra.mxu0 %v16
  %v145 = vpop.f32.mrf.mxu0
  %v146 = vadd.f32 %v68, %v145
  %v147 = vpop.f32.mrf.mxu0
  %148 = vmatprep.mubr.f32.mxu0 0.0
  %149 = vmatmul.mubr.f32.gmra.mxu0 %v17
  %v150 = vpop.f32.mrf.mxu0
  %v151 = vadd.f32 %v68, %v150
  %v152 = vpop.f32.mrf.mxu0
  %153 = vmatprep.mubr.f32.mxu0 0.0
  %154 = vmatmul.mubr.f32.gmra.mxu0 %v18
  %v155 = vpop.f32.mrf.mxu0
  %v156 = vadd.f32 %v68, %v155
  %v157 = vpop.f32.mrf.mxu0
  %158 = vmatprep.mubr.f32.mxu0 0.0
  %159 = vmatmul.mubr.f32.gmra.mxu0 %v19
  %v160 = vpop.f32.mrf.mxu0
  %v161 = vadd.f32 %v68, %v160
  %v162 = vpop.f32.mrf.mxu0
  %163 = vmatprep.mubr.f32.mxu0 0.0
  %164 = vmatmul.mubr.f32.gmra.mxu0 %v20
  %v165 = vpop.f32.mrf.mxu0
  %v166 = vadd.f32 %v68, %v165
  %v167 = vpop.f32.mrf.mxu0
  %168 = vmatprep.mubr.f32.mxu0 0.0
  %169 = vmatmul.mubr.f32.gmra.mxu0 %v21
  %v170 = vpop.f32.mrf.mxu0
  %v171 = vadd.f32 %v68, %v170
  %v172 = vpop.f32.mrf.mxu0
  %173 = vmatprep.mubr.f32.mxu0 0.0
  %174 = vmatmul.mubr.f32.gmra.mxu0 %v22
  %v175 = vpop.f32.mrf.mxu0
  %v176 = vadd.f32 %v68, %v175
  %v177 = vpop.f32.mrf.mxu0
  %178 = vmatprep.mubr.f32.mxu0 0.0
  %179 = vmatmul.mubr.f32.gmra.mxu0 %v23
  %v180 = vpop.f32.mrf.mxu0
  %v181 = vadd.f32 %v68, %v180
  %v182 = vpop.f32.mrf.mxu0
  %183 = vmatprep.mubr.f32.mxu0 0.0
  %184 = vmatmul.mubr.f32.gmra.mxu0 %v24
  %v185 = vpop.f32.mrf.mxu0
  %v186 = vadd.f32 %v68, %v185
  %v187 = vpop.f32.mrf.mxu0
  %188 = vmatprep.mubr.f32.mxu0 0.0
  %189 = vmatmul.mubr.f32.gmra.mxu0 %v25
  %v190 = vpop.f32.mrf.mxu0
  %v191 = vadd.f32 %v68, %v190
  %v192 = vpop.f32.mrf.mxu0
  %193 = vmatprep.mubr.f32.mxu0 0.0
  %194 = vmatmul.mubr.f32.gmra.mxu0 %v26
  %v195 = vpop.f32.mrf.mxu0
  %v196 = vadd.f32 %v68, %v195
  %v197 = vpop.f32.mrf.mxu0
  %198 = vmatprep.mubr.f32.mxu0 0.0
  %199 = vmatmul.mubr.f32.gmra.mxu0 %v27
  %v200 = vpop.f32.mrf.mxu0
  %v201 = vadd.f32 %v68, %v200
  %v202 = vpop.f32.mrf.mxu0
  %203 = vmatprep.mubr.f32.mxu0 0.0
  %204 = vmatmul.mubr.f32.gmra.mxu0 %v28
  %v205 = vpop.f32.mrf.mxu0
  %v206 = vadd.f32 %v68, %v205
  %v207 = vpop.f32.mrf.mxu0
  %208 = vmatprep.mubr.f32.mxu0 0.0
  %209 = vmatmul.mubr.f32.gmra.mxu0 %v29
  %v210 = vpop.f32.mrf.mxu0
  %v211 = vadd.f32 %v68, %v210
  %v212 = vpop.f32.mrf.mxu0
  %213 = vdwg.mxu0
  %v214 = vmax.f32 %v136, 0.0
  %v215 = vmax.f32 %v141, 0.0
  %v216 = vmax.f32 %v146, 0.0
  %v217 = vmax.f32 %v151, 0.0
  %v218 = vmax.f32 %v156, 0.0
  %v219 = vmax.f32 %v161, 0.0
  %v220 = vmax.f32 %v166, 0.0
  %v221 = vmax.f32 %v171, 0.0
  %v222 = vmax.f32 %v176, 0.0
  %v223 = vmax.f32 %v181, 0.0
  %v224 = vmax.f32 %v186, 0.0
  %v225 = vmax.f32 %v191, 0.0
  %v226 = vmax.f32 %v196, 0.0
  %v227 = vmax.f32 %v201, 0.0
  %v228 = vmax.f32 %v206, 0.0
  %v229 = vmax.f32 %v211, 0.0
  %v230 = vadd.f32 %v214, %v215
  %v231 = vadd.f32 %v230, %v216
  %v232 = vadd.f32 %v231, %v217
  %v233 = vadd.f32 %v232, %v218
  %v234 = vadd.f32 %v233, %v219
  %v235 = vadd.f32 %v234, %v220
  %v236 = vadd.f32 %v235, %v221
  %v237 = vadd.f32 %v236, %v222
  %v238 = vadd.f32 %v237, %v223
  %v239 = vadd.f32 %v238, %v224
  %v240 = vadd.f32 %v239, %v225
  %v241 = vadd.f32 %v240, %v226
  %v242 = vadd.f32 %v241, %v227
  %v243 = vadd.f32 %v242, %v228
  %v244 = vadd.f32 %v243, %v229
  %v245 = vrot.slane %v244, 4
  %v246 = vadd.f32 %v244, %v245
  %v247 = vrot.slane %v246, 2
  %v248 = vadd.f32 %v246, %v247
  %v249 = vrot.slane %v248, 1
  %v250 = vadd.f32 %v248, %v249
  %v251 = vmul.f32 %v214, %v214
  %v252 = vmul.f32 %v215, %v215
  %v253 = vmul.f32 %v216, %v216
  %v254 = vmul.f32 %v217, %v217
  %v255 = vmul.f32 %v218, %v218
  %v256 = vmul.f32 %v219, %v219
  %v257 = vmul.f32 %v220, %v220
  %v258 = vmul.f32 %v221, %v221
  %v259 = vmul.f32 %v222, %v222
  %v260 = vmul.f32 %v223, %v223
  %v261 = vmul.f32 %v224, %v224
  %v262 = vmul.f32 %v225, %v225
  %v263 = vmul.f32 %v226, %v226
  %v264 = vmul.f32 %v227, %v227
  %v265 = vmul.f32 %v228, %v228
  %v266 = vmul.f32 %v229, %v229
  %v267 = vadd.f32 %v251, %v252
  %v268 = vadd.f32 %v267, %v253
  %v269 = vadd.f32 %v268, %v254
  %v270 = vadd.f32 %v269, %v255
  %v271 = vadd.f32 %v270, %v256
  %v272 = vadd.f32 %v271, %v257
  %v273 = vadd.f32 %v272, %v258
  %v274 = vadd.f32 %v273, %v259
  %v275 = vadd.f32 %v274, %v260
  %v276 = vadd.f32 %v275, %v261
  %v277 = vadd.f32 %v276, %v262
  %v278 = vadd.f32 %v277, %v263
  %v279 = vadd.f32 %v278, %v264
  %v280 = vadd.f32 %v279, %v265
  %v281 = vadd.f32 %v280, %v266
  %v282 = vrot.slane %v281, 4
  %v283 = vadd.f32 %v281, %v282
  %v284 = vrot.slane %v283, 2
  %v285 = vadd.f32 %v283, %v284
  %v286 = vrot.slane %v285, 1
  %v287 = vadd.f32 %v285, %v286
  %v288 = vmul.f32 %v250, 0.0078125
  %v289 = vmul.f32 %v287, 0.0078125
  %v290 = vmul.f32 %v288, %v288
  %v291 = vsub.f32 %v289, %v290
  %v292 = vmax.f32 %v291, 0.0
  %v293 = vadd.f32 %v292, 1e-05
  %v294 = vrsqrt.pop %v293
  %v295 = vmul.f32 %v294, %v63
  %v296 = vmul.f32 %v288, %v295
  %v297 = vsub.f32 %v64, %v296
  %v298 = vlaneseq
  %v299 = vshrl.u32 %v298, 7
  %v300 = vsub.s32 0, %v299
  %v301 = vrot.slane %v295, %v300
  %v302 = vmul.f32 %v214, %v301
  %v303 = vmul.f32 %v215, %v301
  %v304 = vmul.f32 %v216, %v301
  %v305 = vmul.f32 %v217, %v301
  %v306 = vmul.f32 %v218, %v301
  %v307 = vmul.f32 %v219, %v301
  %v308 = vmul.f32 %v220, %v301
  %v309 = vmul.f32 %v221, %v301
  %v310 = vmul.f32 %v222, %v301
  %v311 = vmul.f32 %v223, %v301
  %v312 = vmul.f32 %v224, %v301
  %v313 = vmul.f32 %v225, %v301
  %v314 = vmul.f32 %v226, %v301
  %v315 = vmul.f32 %v227, %v301
  %v316 = vmul.f32 %v228, %v301
  %v317 = vmul.f32 %v229, %v301
  %v318 = vlaneseq
  %v319 = vshrl.u32 %v318, 7
  %v320 = vsub.s32 0, %v319
  %v321 = vrot.slane %v297, %v320
  %v322 = vadd.f32 %v302, %v321
  %v323 = vadd.f32 %v303, %v321
  %v324 = vadd.f32 %v304, %v321
  %v325 = vadd.f32 %v305, %v321
  %v326 = vadd.f32 %v306, %v321
  %v327 = vadd.f32 %v307, %v321
  %v328 = vadd.f32 %v308, %v321
  %v329 = vadd.f32 %v309, %v321
  %v330 = vadd.f32 %v310, %v321
  %v331 = vadd.f32 %v311, %v321
  %v332 = vadd.f32 %v312, %v321
  %v333 = vadd.f32 %v313, %v321
  %v334 = vadd.f32 %v314, %v321
  %v335 = vadd.f32 %v315, %v321
  %v336 = vadd.f32 %v316, %v321
  %v337 = vadd.f32 %v317, %v321
  %s338 = scalar_lea.vmem %s1, 64
  %v339 = vld [vmem:[%s338] sm:$0xf]
  %v340 = vld [vmem:[%s338 + $0x4] sm:$0xf]
  %v341 = vld [vmem:[%s338 + $0x8] sm:$0xf]
  %v342 = vld [vmem:[%s338 + $0xc] sm:$0xf]
  %v343 = vld [vmem:[%s338 + $0x10] sm:$0xf]
  %v344 = vld [vmem:[%s338 + $0x14] sm:$0xf]
  %v345 = vld [vmem:[%s338 + $0x18] sm:$0xf]
  %v346 = vld [vmem:[%s338 + $0x1c] sm:$0xf]
  %v347 = vld [vmem:[%s338 + $0x20] sm:$0xf]
  %v348 = vld [vmem:[%s338 + $0x24] sm:$0xf]
  %v349 = vld [vmem:[%s338 + $0x28] sm:$0xf]
  %v350 = vld [vmem:[%s338 + $0x2c] sm:$0xf]
  %v351 = vld [vmem:[%s338 + $0x30] sm:$0xf]
  %v352 = vld [vmem:[%s338 + $0x34] sm:$0xf]
  %v353 = vld [vmem:[%s338 + $0x38] sm:$0xf]
  %v354 = vld [vmem:[%s338 + $0x3c] sm:$0xf]
  %v355 = vunpack.c.l.bf16 %v339
  %v356 = vunpack.c.l.bf16 %v340
  %v357 = vunpack.c.l.bf16 %v341
  %v358 = vunpack.c.l.bf16 %v342
  %v359 = vunpack.c.l.bf16 %v343
  %v360 = vunpack.c.l.bf16 %v344
  %v361 = vunpack.c.l.bf16 %v345
  %v362 = vunpack.c.l.bf16 %v346
  %v363 = vunpack.c.l.bf16 %v347
  %v364 = vunpack.c.l.bf16 %v348
  %v365 = vunpack.c.l.bf16 %v349
  %v366 = vunpack.c.l.bf16 %v350
  %v367 = vunpack.c.l.bf16 %v351
  %v368 = vunpack.c.l.bf16 %v352
  %v369 = vunpack.c.l.bf16 %v353
  %v370 = vunpack.c.l.bf16 %v354
  %v371 = vld [vmem:[%s2 + $0x1] sm:$0x1]
  %v372 = vld [vmem:[%s2 + $0x4] sm:$0x1]
  %v373 = vld [vmem:[%s2 + $0x7] sm:$0x1]
  %v374 = vlaneseq
  %v375 = vshrl.u32 %v374, 7
  %v376 = vsub.s32 0, %v375
  %v377 = vrot.slane %v371, %v376
  %378 = vmatprep.subr.mxu0 0.0
  %379 = vmatpush1.msra.mxu0 %v370
  %380 = vmatprep.subr.mxu0 0.0
  %381 = vmatpush1.msra.mxu0 %v369
  %382 = vmatprep.subr.mxu0 0.0
  %383 = vmatpush1.msra.mxu0 %v368
  %384 = vmatprep.subr.mxu0 0.0
  %385 = vmatpush1.msra.mxu0 %v367
  %386 = vmatprep.subr.mxu0 0.0
  %387 = vmatpush1.msra.mxu0 %v366
  %388 = vmatprep.subr.mxu0 0.0
  %389 = vmatpush1.msra.mxu0 %v365
  %390 = vmatprep.subr.mxu0 0.0
  %391 = vmatpush1.msra.mxu0 %v364
  %392 = vmatprep.subr.mxu0 0.0
  %393 = vmatpush1.msra.mxu0 %v363
  %394 = vmatprep.subr.mxu0 0.0
  %395 = vmatpush1.msra.mxu0 %v362
  %396 = vmatprep.subr.mxu0 0.0
  %397 = vmatpush1.msra.mxu0 %v361
  %398 = vmatprep.subr.mxu0 0.0
  %399 = vmatpush1.msra.mxu0 %v360
  %400 = vmatprep.subr.mxu0 0.0
  %401 = vmatpush1.msra.mxu0 %v359
  %402 = vmatprep.subr.mxu0 0.0
  %403 = vmatpush1.msra.mxu0 %v358
  %404 = vmatprep.subr.mxu0 0.0
  %405 = vmatpush1.msra.mxu0 %v357
  %406 = vmatprep.subr.mxu0 0.0
  %407 = vmatpush1.msra.mxu0 %v356
  %408 = vmatprep.subr.mxu0 0.0
  %409 = vmatpush1.msra.mxu0 %v355
  %410 = vmatprep.subr.mxu0 0.0
  %411 = vmatpush2.msra.mxu0 0.0
  %412 = vmatprep.subr.mxu0 0.0
  %413 = vmatpush2.msra.mxu0 0.0
  %414 = vmatprep.subr.mxu0 0.0
  %415 = vmatpush2.msra.mxu0 0.0
  %416 = vmatprep.subr.mxu0 0.0
  %417 = vmatpush2.msra.mxu0 0.0
  %418 = vmatprep.subr.mxu0 0.0
  %419 = vmatpush2.msra.mxu0 0.0
  %420 = vmatprep.subr.mxu0 0.0
  %421 = vmatpush2.msra.mxu0 0.0
  %422 = vmatprep.subr.mxu0 0.0
  %423 = vmatpush2.msra.mxu0 0.0
  %424 = vmatprep.subr.mxu0 0.0
  %425 = vmatpush2.msra.mxu0 0.0
  %426 = vmatprep.subr.mxu0 0.0
  %427 = vmatpush2.msra.mxu0 0.0
  %428 = vmatprep.subr.mxu0 0.0
  %429 = vmatpush2.msra.mxu0 0.0
  %430 = vmatprep.subr.mxu0 0.0
  %431 = vmatpush2.msra.mxu0 0.0
  %432 = vmatprep.subr.mxu0 0.0
  %433 = vmatpush2.msra.mxu0 0.0
  %434 = vmatprep.subr.mxu0 0.0
  %435 = vmatpush2.msra.mxu0 0.0
  %436 = vmatprep.subr.mxu0 0.0
  %437 = vmatpush2.msra.mxu0 0.0
  %438 = vmatprep.subr.mxu0 0.0
  %439 = vmatpush2.msra.mxu0 0.0
  %440 = vmatprep.subr.mxu0 0.0
  %441 = vmatpush2.msra.mxu0 0.0
  %442 = vmatprep.mubr.f32.mxu0 0.0
  %443 = vmatmul.mubr.f32.gmra.mxu0 %v322
  %v444 = vpop.f32.mrf.mxu0
  %v445 = vadd.f32 %v377, %v444
  %v446 = vpop.f32.mrf.mxu0
  %447 = vmatprep.mubr.f32.mxu0 0.0
  %448 = vmatmul.mubr.f32.gmra.mxu0 %v323
  %v449 = vpop.f32.mrf.mxu0
  %v450 = vadd.f32 %v377, %v449
  %v451 = vpop.f32.mrf.mxu0
  %452 = vmatprep.mubr.f32.mxu0 0.0
  %453 = vmatmul.mubr.f32.gmra.mxu0 %v324
  %v454 = vpop.f32.mrf.mxu0
  %v455 = vadd.f32 %v377, %v454
  %v456 = vpop.f32.mrf.mxu0
  %457 = vmatprep.mubr.f32.mxu0 0.0
  %458 = vmatmul.mubr.f32.gmra.mxu0 %v325
  %v459 = vpop.f32.mrf.mxu0
  %v460 = vadd.f32 %v377, %v459
  %v461 = vpop.f32.mrf.mxu0
  %462 = vmatprep.mubr.f32.mxu0 0.0
  %463 = vmatmul.mubr.f32.gmra.mxu0 %v326
  %v464 = vpop.f32.mrf.mxu0
  %v465 = vadd.f32 %v377, %v464
  %v466 = vpop.f32.mrf.mxu0
  %467 = vmatprep.mubr.f32.mxu0 0.0
  %468 = vmatmul.mubr.f32.gmra.mxu0 %v327
  %v469 = vpop.f32.mrf.mxu0
  %v470 = vadd.f32 %v377, %v469
  %v471 = vpop.f32.mrf.mxu0
  %472 = vmatprep.mubr.f32.mxu0 0.0
  %473 = vmatmul.mubr.f32.gmra.mxu0 %v328
  %v474 = vpop.f32.mrf.mxu0
  %v475 = vadd.f32 %v377, %v474
  %v476 = vpop.f32.mrf.mxu0
  %477 = vmatprep.mubr.f32.mxu0 0.0
  %478 = vmatmul.mubr.f32.gmra.mxu0 %v329
  %v479 = vpop.f32.mrf.mxu0
  %v480 = vadd.f32 %v377, %v479
  %v481 = vpop.f32.mrf.mxu0
  %482 = vmatprep.mubr.f32.mxu0 0.0
  %483 = vmatmul.mubr.f32.gmra.mxu0 %v330
  %v484 = vpop.f32.mrf.mxu0
  %v485 = vadd.f32 %v377, %v484
  %v486 = vpop.f32.mrf.mxu0
  %487 = vmatprep.mubr.f32.mxu0 0.0
  %488 = vmatmul.mubr.f32.gmra.mxu0 %v331
  %v489 = vpop.f32.mrf.mxu0
  %v490 = vadd.f32 %v377, %v489
  %v491 = vpop.f32.mrf.mxu0
  %492 = vmatprep.mubr.f32.mxu0 0.0
  %493 = vmatmul.mubr.f32.gmra.mxu0 %v332
  %v494 = vpop.f32.mrf.mxu0
  %v495 = vadd.f32 %v377, %v494
  %v496 = vpop.f32.mrf.mxu0
  %497 = vmatprep.mubr.f32.mxu0 0.0
  %498 = vmatmul.mubr.f32.gmra.mxu0 %v333
  %v499 = vpop.f32.mrf.mxu0
  %v500 = vadd.f32 %v377, %v499
  %v501 = vpop.f32.mrf.mxu0
  %502 = vmatprep.mubr.f32.mxu0 0.0
  %503 = vmatmul.mubr.f32.gmra.mxu0 %v334
  %v504 = vpop.f32.mrf.mxu0
  %v505 = vadd.f32 %v377, %v504
  %v506 = vpop.f32.mrf.mxu0
  %507 = vmatprep.mubr.f32.mxu0 0.0
  %508 = vmatmul.mubr.f32.gmra.mxu0 %v335
  %v509 = vpop.f32.mrf.mxu0
  %v510 = vadd.f32 %v377, %v509
  %v511 = vpop.f32.mrf.mxu0
  %512 = vmatprep.mubr.f32.mxu0 0.0
  %513 = vmatmul.mubr.f32.gmra.mxu0 %v336
  %v514 = vpop.f32.mrf.mxu0
  %v515 = vadd.f32 %v377, %v514
  %v516 = vpop.f32.mrf.mxu0
  %517 = vmatprep.mubr.f32.mxu0 0.0
  %518 = vmatmul.mubr.f32.gmra.mxu0 %v337
  %v519 = vpop.f32.mrf.mxu0
  %v520 = vadd.f32 %v377, %v519
  %v521 = vpop.f32.mrf.mxu0
  %522 = vdwg.mxu0
  %v523 = vmax.f32 %v445, 0.0
  %v524 = vmax.f32 %v450, 0.0
  %v525 = vmax.f32 %v455, 0.0
  %v526 = vmax.f32 %v460, 0.0
  %v527 = vmax.f32 %v465, 0.0
  %v528 = vmax.f32 %v470, 0.0
  %v529 = vmax.f32 %v475, 0.0
  %v530 = vmax.f32 %v480, 0.0
  %v531 = vmax.f32 %v485, 0.0
  %v532 = vmax.f32 %v490, 0.0
  %v533 = vmax.f32 %v495, 0.0
  %v534 = vmax.f32 %v500, 0.0
  %v535 = vmax.f32 %v505, 0.0
  %v536 = vmax.f32 %v510, 0.0
  %v537 = vmax.f32 %v515, 0.0
  %v538 = vmax.f32 %v520, 0.0
  %v539 = vadd.f32 %v523, %v524
  %v540 = vadd.f32 %v539, %v525
  %v541 = vadd.f32 %v540, %v526
  %v542 = vadd.f32 %v541, %v527
  %v543 = vadd.f32 %v542, %v528
  %v544 = vadd.f32 %v543, %v529
  %v545 = vadd.f32 %v544, %v530
  %v546 = vadd.f32 %v545, %v531
  %v547 = vadd.f32 %v546, %v532
  %v548 = vadd.f32 %v547, %v533
  %v549 = vadd.f32 %v548, %v534
  %v550 = vadd.f32 %v549, %v535
  %v551 = vadd.f32 %v550, %v536
  %v552 = vadd.f32 %v551, %v537
  %v553 = vadd.f32 %v552, %v538
  %v554 = vrot.slane %v553, 4
  %v555 = vadd.f32 %v553, %v554
  %v556 = vrot.slane %v555, 2
  %v557 = vadd.f32 %v555, %v556
  %v558 = vrot.slane %v557, 1
  %v559 = vadd.f32 %v557, %v558
  %v560 = vmul.f32 %v523, %v523
  %v561 = vmul.f32 %v524, %v524
  %v562 = vmul.f32 %v525, %v525
  %v563 = vmul.f32 %v526, %v526
  %v564 = vmul.f32 %v527, %v527
  %v565 = vmul.f32 %v528, %v528
  %v566 = vmul.f32 %v529, %v529
  %v567 = vmul.f32 %v530, %v530
  %v568 = vmul.f32 %v531, %v531
  %v569 = vmul.f32 %v532, %v532
  %v570 = vmul.f32 %v533, %v533
  %v571 = vmul.f32 %v534, %v534
  %v572 = vmul.f32 %v535, %v535
  %v573 = vmul.f32 %v536, %v536
  %v574 = vmul.f32 %v537, %v537
  %v575 = vmul.f32 %v538, %v538
  %v576 = vadd.f32 %v560, %v561
  %v577 = vadd.f32 %v576, %v562
  %v578 = vadd.f32 %v577, %v563
  %v579 = vadd.f32 %v578, %v564
  %v580 = vadd.f32 %v579, %v565
  %v581 = vadd.f32 %v580, %v566
  %v582 = vadd.f32 %v581, %v567
  %v583 = vadd.f32 %v582, %v568
  %v584 = vadd.f32 %v583, %v569
  %v585 = vadd.f32 %v584, %v570
  %v586 = vadd.f32 %v585, %v571
  %v587 = vadd.f32 %v586, %v572
  %v588 = vadd.f32 %v587, %v573
  %v589 = vadd.f32 %v588, %v574
  %v590 = vadd.f32 %v589, %v575
  %v591 = vrot.slane %v590, 4
  %v592 = vadd.f32 %v590, %v591
  %v593 = vrot.slane %v592, 2
  %v594 = vadd.f32 %v592, %v593
  %v595 = vrot.slane %v594, 1
  %v596 = vadd.f32 %v594, %v595
  %v597 = vmul.f32 %v559, 0.0078125
  %v598 = vmul.f32 %v596, 0.0078125
  %v599 = vmul.f32 %v597, %v597
  %v600 = vsub.f32 %v598, %v599
  %v601 = vmax.f32 %v600, 0.0
  %v602 = vadd.f32 %v601, 1e-05
  %v603 = vrsqrt.pop %v602
  %v604 = vmul.f32 %v603, %v372
  %v605 = vmul.f32 %v597, %v604
  %v606 = vsub.f32 %v373, %v605
  %v607 = vlaneseq
  %v608 = vshrl.u32 %v607, 7
  %v609 = vsub.s32 0, %v608
  %v610 = vrot.slane %v604, %v609
  %v611 = vmul.f32 %v523, %v610
  %v612 = vmul.f32 %v524, %v610
  %v613 = vmul.f32 %v525, %v610
  %v614 = vmul.f32 %v526, %v610
  %v615 = vmul.f32 %v527, %v610
  %v616 = vmul.f32 %v528, %v610
  %v617 = vmul.f32 %v529, %v610
  %v618 = vmul.f32 %v530, %v610
  %v619 = vmul.f32 %v531, %v610
  %v620 = vmul.f32 %v532, %v610
  %v621 = vmul.f32 %v533, %v610
  %v622 = vmul.f32 %v534, %v610
  %v623 = vmul.f32 %v535, %v610
  %v624 = vmul.f32 %v536, %v610
  %v625 = vmul.f32 %v537, %v610
  %v626 = vmul.f32 %v538, %v610
  %v627 = vlaneseq
  %v628 = vshrl.u32 %v627, 7
  %v629 = vsub.s32 0, %v628
  %v630 = vrot.slane %v606, %v629
  %v631 = vadd.f32 %v611, %v630
  %v632 = vadd.f32 %v612, %v630
  %v633 = vadd.f32 %v613, %v630
  %v634 = vadd.f32 %v614, %v630
  %v635 = vadd.f32 %v615, %v630
  %v636 = vadd.f32 %v616, %v630
  %v637 = vadd.f32 %v617, %v630
  %v638 = vadd.f32 %v618, %v630
  %v639 = vadd.f32 %v619, %v630
  %v640 = vadd.f32 %v620, %v630
  %v641 = vadd.f32 %v621, %v630
  %v642 = vadd.f32 %v622, %v630
  %v643 = vadd.f32 %v623, %v630
  %v644 = vadd.f32 %v624, %v630
  %v645 = vadd.f32 %v625, %v630
  %v646 = vadd.f32 %v626, %v630
  %s647 = scalar_lea.vmem %s1, 128
  %v648 = vld [vmem:[%s647] sm:$0xf]
  %v649 = vld [vmem:[%s647 + $0x4] sm:$0xf]
  %v650 = vld [vmem:[%s647 + $0x8] sm:$0xf]
  %v651 = vld [vmem:[%s647 + $0xc] sm:$0xf]
  %v652 = vld [vmem:[%s647 + $0x10] sm:$0xf]
  %v653 = vld [vmem:[%s647 + $0x14] sm:$0xf]
  %v654 = vld [vmem:[%s647 + $0x18] sm:$0xf]
  %v655 = vld [vmem:[%s647 + $0x1c] sm:$0xf]
  %v656 = vld [vmem:[%s647 + $0x20] sm:$0xf]
  %v657 = vld [vmem:[%s647 + $0x24] sm:$0xf]
  %v658 = vld [vmem:[%s647 + $0x28] sm:$0xf]
  %v659 = vld [vmem:[%s647 + $0x2c] sm:$0xf]
  %v660 = vld [vmem:[%s647 + $0x30] sm:$0xf]
  %v661 = vld [vmem:[%s647 + $0x34] sm:$0xf]
  %v662 = vld [vmem:[%s647 + $0x38] sm:$0xf]
  %v663 = vld [vmem:[%s647 + $0x3c] sm:$0xf]
  %v664 = vunpack.c.l.bf16 %v648
  %v665 = vunpack.c.l.bf16 %v649
  %v666 = vunpack.c.l.bf16 %v650
  %v667 = vunpack.c.l.bf16 %v651
  %v668 = vunpack.c.l.bf16 %v652
  %v669 = vunpack.c.l.bf16 %v653
  %v670 = vunpack.c.l.bf16 %v654
  %v671 = vunpack.c.l.bf16 %v655
  %v672 = vunpack.c.l.bf16 %v656
  %v673 = vunpack.c.l.bf16 %v657
  %v674 = vunpack.c.l.bf16 %v658
  %v675 = vunpack.c.l.bf16 %v659
  %v676 = vunpack.c.l.bf16 %v660
  %v677 = vunpack.c.l.bf16 %v661
  %v678 = vunpack.c.l.bf16 %v662
  %v679 = vunpack.c.l.bf16 %v663
  %v680 = vld [vmem:[%s2 + $0x2] sm:$0x1]
  %v681 = vld [vmem:[%s2 + $0x5] sm:$0x1]
  %v682 = vld [vmem:[%s2 + $0x8] sm:$0x1]
  %v683 = vlaneseq
  %v684 = vshrl.u32 %v683, 7
  %v685 = vsub.s32 0, %v684
  %v686 = vrot.slane %v680, %v685
  %687 = vmatprep.subr.mxu0 0.0
  %688 = vmatpush1.msra.mxu0 %v679
  %689 = vmatprep.subr.mxu0 0.0
  %690 = vmatpush1.msra.mxu0 %v678
  %691 = vmatprep.subr.mxu0 0.0
  %692 = vmatpush1.msra.mxu0 %v677
  %693 = vmatprep.subr.mxu0 0.0
  %694 = vmatpush1.msra.mxu0 %v676
  %695 = vmatprep.subr.mxu0 0.0
  %696 = vmatpush1.msra.mxu0 %v675
  %697 = vmatprep.subr.mxu0 0.0
  %698 = vmatpush1.msra.mxu0 %v674
  %699 = vmatprep.subr.mxu0 0.0
  %700 = vmatpush1.msra.mxu0 %v673
  %701 = vmatprep.subr.mxu0 0.0
  %702 = vmatpush1.msra.mxu0 %v672
  %703 = vmatprep.subr.mxu0 0.0
  %704 = vmatpush1.msra.mxu0 %v671
  %705 = vmatprep.subr.mxu0 0.0
  %706 = vmatpush1.msra.mxu0 %v670
  %707 = vmatprep.subr.mxu0 0.0
  %708 = vmatpush1.msra.mxu0 %v669
  %709 = vmatprep.subr.mxu0 0.0
  %710 = vmatpush1.msra.mxu0 %v668
  %711 = vmatprep.subr.mxu0 0.0
  %712 = vmatpush1.msra.mxu0 %v667
  %713 = vmatprep.subr.mxu0 0.0
  %714 = vmatpush1.msra.mxu0 %v666
  %715 = vmatprep.subr.mxu0 0.0
  %716 = vmatpush1.msra.mxu0 %v665
  %717 = vmatprep.subr.mxu0 0.0
  %718 = vmatpush1.msra.mxu0 %v664
  %719 = vmatprep.subr.mxu0 0.0
  %720 = vmatpush2.msra.mxu0 0.0
  %721 = vmatprep.subr.mxu0 0.0
  %722 = vmatpush2.msra.mxu0 0.0
  %723 = vmatprep.subr.mxu0 0.0
  %724 = vmatpush2.msra.mxu0 0.0
  %725 = vmatprep.subr.mxu0 0.0
  %726 = vmatpush2.msra.mxu0 0.0
  %727 = vmatprep.subr.mxu0 0.0
  %728 = vmatpush2.msra.mxu0 0.0
  %729 = vmatprep.subr.mxu0 0.0
  %730 = vmatpush2.msra.mxu0 0.0
  %731 = vmatprep.subr.mxu0 0.0
  %732 = vmatpush2.msra.mxu0 0.0
  %733 = vmatprep.subr.mxu0 0.0
  %734 = vmatpush2.msra.mxu0 0.0
  %735 = vmatprep.subr.mxu0 0.0
  %736 = vmatpush2.msra.mxu0 0.0
  %737 = vmatprep.subr.mxu0 0.0
  %738 = vmatpush2.msra.mxu0 0.0
  %739 = vmatprep.subr.mxu0 0.0
  %740 = vmatpush2.msra.mxu0 0.0
  %741 = vmatprep.subr.mxu0 0.0
  %742 = vmatpush2.msra.mxu0 0.0
  %743 = vmatprep.subr.mxu0 0.0
  %744 = vmatpush2.msra.mxu0 0.0
  %745 = vmatprep.subr.mxu0 0.0
  %746 = vmatpush2.msra.mxu0 0.0
  %747 = vmatprep.subr.mxu0 0.0
  %748 = vmatpush2.msra.mxu0 0.0
  %749 = vmatprep.subr.mxu0 0.0
  %750 = vmatpush2.msra.mxu0 0.0
  %751 = vmatprep.mubr.f32.mxu0 0.0
  %752 = vmatmul.mubr.f32.gmra.mxu0 %v631
  %v753 = vpop.f32.mrf.mxu0
  %v754 = vadd.f32 %v686, %v753
  %v755 = vpop.f32.mrf.mxu0
  %756 = vmatprep.mubr.f32.mxu0 0.0
  %757 = vmatmul.mubr.f32.gmra.mxu0 %v632
  %v758 = vpop.f32.mrf.mxu0
  %v759 = vadd.f32 %v686, %v758
  %v760 = vpop.f32.mrf.mxu0
  %761 = vmatprep.mubr.f32.mxu0 0.0
  %762 = vmatmul.mubr.f32.gmra.mxu0 %v633
  %v763 = vpop.f32.mrf.mxu0
  %v764 = vadd.f32 %v686, %v763
  %v765 = vpop.f32.mrf.mxu0
  %766 = vmatprep.mubr.f32.mxu0 0.0
  %767 = vmatmul.mubr.f32.gmra.mxu0 %v634
  %v768 = vpop.f32.mrf.mxu0
  %v769 = vadd.f32 %v686, %v768
  %v770 = vpop.f32.mrf.mxu0
  %771 = vmatprep.mubr.f32.mxu0 0.0
  %772 = vmatmul.mubr.f32.gmra.mxu0 %v635
  %v773 = vpop.f32.mrf.mxu0
  %v774 = vadd.f32 %v686, %v773
  %v775 = vpop.f32.mrf.mxu0
  %776 = vmatprep.mubr.f32.mxu0 0.0
  %777 = vmatmul.mubr.f32.gmra.mxu0 %v636
  %v778 = vpop.f32.mrf.mxu0
  %v779 = vadd.f32 %v686, %v778
  %v780 = vpop.f32.mrf.mxu0
  %781 = vmatprep.mubr.f32.mxu0 0.0
  %782 = vmatmul.mubr.f32.gmra.mxu0 %v637
  %v783 = vpop.f32.mrf.mxu0
  %v784 = vadd.f32 %v686, %v783
  %v785 = vpop.f32.mrf.mxu0
  %786 = vmatprep.mubr.f32.mxu0 0.0
  %787 = vmatmul.mubr.f32.gmra.mxu0 %v638
  %v788 = vpop.f32.mrf.mxu0
  %v789 = vadd.f32 %v686, %v788
  %v790 = vpop.f32.mrf.mxu0
  %791 = vmatprep.mubr.f32.mxu0 0.0
  %792 = vmatmul.mubr.f32.gmra.mxu0 %v639
  %v793 = vpop.f32.mrf.mxu0
  %v794 = vadd.f32 %v686, %v793
  %v795 = vpop.f32.mrf.mxu0
  %796 = vmatprep.mubr.f32.mxu0 0.0
  %797 = vmatmul.mubr.f32.gmra.mxu0 %v640
  %v798 = vpop.f32.mrf.mxu0
  %v799 = vadd.f32 %v686, %v798
  %v800 = vpop.f32.mrf.mxu0
  %801 = vmatprep.mubr.f32.mxu0 0.0
  %802 = vmatmul.mubr.f32.gmra.mxu0 %v641
  %v803 = vpop.f32.mrf.mxu0
  %v804 = vadd.f32 %v686, %v803
  %v805 = vpop.f32.mrf.mxu0
  %806 = vmatprep.mubr.f32.mxu0 0.0
  %807 = vmatmul.mubr.f32.gmra.mxu0 %v642
  %v808 = vpop.f32.mrf.mxu0
  %v809 = vadd.f32 %v686, %v808
  %v810 = vpop.f32.mrf.mxu0
  %811 = vmatprep.mubr.f32.mxu0 0.0
  %812 = vmatmul.mubr.f32.gmra.mxu0 %v643
  %v813 = vpop.f32.mrf.mxu0
  %v814 = vadd.f32 %v686, %v813
  %v815 = vpop.f32.mrf.mxu0
  %816 = vmatprep.mubr.f32.mxu0 0.0
  %817 = vmatmul.mubr.f32.gmra.mxu0 %v644
  %v818 = vpop.f32.mrf.mxu0
  %v819 = vadd.f32 %v686, %v818
  %v820 = vpop.f32.mrf.mxu0
  %821 = vmatprep.mubr.f32.mxu0 0.0
  %822 = vmatmul.mubr.f32.gmra.mxu0 %v645
  %v823 = vpop.f32.mrf.mxu0
  %v824 = vadd.f32 %v686, %v823
  %v825 = vpop.f32.mrf.mxu0
  %826 = vmatprep.mubr.f32.mxu0 0.0
  %827 = vmatmul.mubr.f32.gmra.mxu0 %v646
  %v828 = vpop.f32.mrf.mxu0
  %v829 = vadd.f32 %v686, %v828
  %v830 = vpop.f32.mrf.mxu0
  %831 = vdwg.mxu0
  %v832 = vmax.f32 %v754, 0.0
  %v833 = vmax.f32 %v759, 0.0
  %v834 = vmax.f32 %v764, 0.0
  %v835 = vmax.f32 %v769, 0.0
  %v836 = vmax.f32 %v774, 0.0
  %v837 = vmax.f32 %v779, 0.0
  %v838 = vmax.f32 %v784, 0.0
  %v839 = vmax.f32 %v789, 0.0
  %v840 = vmax.f32 %v794, 0.0
  %v841 = vmax.f32 %v799, 0.0
  %v842 = vmax.f32 %v804, 0.0
  %v843 = vmax.f32 %v809, 0.0
  %v844 = vmax.f32 %v814, 0.0
  %v845 = vmax.f32 %v819, 0.0
  %v846 = vmax.f32 %v824, 0.0
  %v847 = vmax.f32 %v829, 0.0
  %v848 = vadd.f32 %v832, %v833
  %v849 = vadd.f32 %v848, %v834
  %v850 = vadd.f32 %v849, %v835
  %v851 = vadd.f32 %v850, %v836
  %v852 = vadd.f32 %v851, %v837
  %v853 = vadd.f32 %v852, %v838
  %v854 = vadd.f32 %v853, %v839
  %v855 = vadd.f32 %v854, %v840
  %v856 = vadd.f32 %v855, %v841
  %v857 = vadd.f32 %v856, %v842
  %v858 = vadd.f32 %v857, %v843
  %v859 = vadd.f32 %v858, %v844
  %v860 = vadd.f32 %v859, %v845
  %v861 = vadd.f32 %v860, %v846
  %v862 = vadd.f32 %v861, %v847
  %v863 = vrot.slane %v862, 4
  %v864 = vadd.f32 %v862, %v863
  %v865 = vrot.slane %v864, 2
  %v866 = vadd.f32 %v864, %v865
  %v867 = vrot.slane %v866, 1
  %v868 = vadd.f32 %v866, %v867
  %v869 = vmul.f32 %v832, %v832
  %v870 = vmul.f32 %v833, %v833
  %v871 = vmul.f32 %v834, %v834
  %v872 = vmul.f32 %v835, %v835
  %v873 = vmul.f32 %v836, %v836
  %v874 = vmul.f32 %v837, %v837
  %v875 = vmul.f32 %v838, %v838
  %v876 = vmul.f32 %v839, %v839
  %v877 = vmul.f32 %v840, %v840
  %v878 = vmul.f32 %v841, %v841
  %v879 = vmul.f32 %v842, %v842
  %v880 = vmul.f32 %v843, %v843
  %v881 = vmul.f32 %v844, %v844
  %v882 = vmul.f32 %v845, %v845
  %v883 = vmul.f32 %v846, %v846
  %v884 = vmul.f32 %v847, %v847
  %v885 = vadd.f32 %v869, %v870
  %v886 = vadd.f32 %v885, %v871
  %v887 = vadd.f32 %v886, %v872
  %v888 = vadd.f32 %v887, %v873
  %v889 = vadd.f32 %v888, %v874
  %v890 = vadd.f32 %v889, %v875
  %v891 = vadd.f32 %v890, %v876
  %v892 = vadd.f32 %v891, %v877
  %v893 = vadd.f32 %v892, %v878
  %v894 = vadd.f32 %v893, %v879
  %v895 = vadd.f32 %v894, %v880
  %v896 = vadd.f32 %v895, %v881
  %v897 = vadd.f32 %v896, %v882
  %v898 = vadd.f32 %v897, %v883
  %v899 = vadd.f32 %v898, %v884
  %v900 = vrot.slane %v899, 4
  %v901 = vadd.f32 %v899, %v900
  %v902 = vrot.slane %v901, 2
  %v903 = vadd.f32 %v901, %v902
  %v904 = vrot.slane %v903, 1
  %v905 = vadd.f32 %v903, %v904
  %v906 = vmul.f32 %v868, 0.0078125
  %v907 = vmul.f32 %v905, 0.0078125
  %v908 = vmul.f32 %v906, %v906
  %v909 = vsub.f32 %v907, %v908
  %v910 = vmax.f32 %v909, 0.0
  %v911 = vadd.f32 %v910, 1e-05
  %v912 = vrsqrt.pop %v911
  %v913 = vmul.f32 %v912, %v681
  %v914 = vmul.f32 %v906, %v913
  %v915 = vsub.f32 %v682, %v914
  %v916 = vlaneseq
  %v917 = vshrl.u32 %v916, 7
  %v918 = vsub.s32 0, %v917
  %v919 = vrot.slane %v913, %v918
  %v920 = vmul.f32 %v832, %v919
  %v921 = vmul.f32 %v833, %v919
  %v922 = vmul.f32 %v834, %v919
  %v923 = vmul.f32 %v835, %v919
  %v924 = vmul.f32 %v836, %v919
  %v925 = vmul.f32 %v837, %v919
  %v926 = vmul.f32 %v838, %v919
  %v927 = vmul.f32 %v839, %v919
  %v928 = vmul.f32 %v840, %v919
  %v929 = vmul.f32 %v841, %v919
  %v930 = vmul.f32 %v842, %v919
  %v931 = vmul.f32 %v843, %v919
  %v932 = vmul.f32 %v844, %v919
  %v933 = vmul.f32 %v845, %v919
  %v934 = vmul.f32 %v846, %v919
  %v935 = vmul.f32 %v847, %v919
  %v936 = vlaneseq
  %v937 = vshrl.u32 %v936, 7
  %v938 = vsub.s32 0, %v937
  %v939 = vrot.slane %v915, %v938
  %v940 = vadd.f32 %v920, %v939
  %v941 = vadd.f32 %v921, %v939
  %v942 = vadd.f32 %v922, %v939
  %v943 = vadd.f32 %v923, %v939
  %v944 = vadd.f32 %v924, %v939
  %v945 = vadd.f32 %v925, %v939
  %v946 = vadd.f32 %v926, %v939
  %v947 = vadd.f32 %v927, %v939
  %v948 = vadd.f32 %v928, %v939
  %v949 = vadd.f32 %v929, %v939
  %v950 = vadd.f32 %v930, %v939
  %v951 = vadd.f32 %v931, %v939
  %v952 = vadd.f32 %v932, %v939
  %v953 = vadd.f32 %v933, %v939
  %v954 = vadd.f32 %v934, %v939
  %v955 = vadd.f32 %v935, %v939
  %s956 = scalar_lea.vmem %s1, 192
  %v957 = vld [vmem:[%s956] sm:$0xf]
  %v958 = vld [vmem:[%s956 + $0x4] sm:$0xf]
  %v959 = vld [vmem:[%s956 + $0x8] sm:$0xf]
  %v960 = vld [vmem:[%s956 + $0xc] sm:$0xf]
  %v961 = vld [vmem:[%s956 + $0x10] sm:$0xf]
  %v962 = vld [vmem:[%s956 + $0x14] sm:$0xf]
  %v963 = vld [vmem:[%s956 + $0x18] sm:$0xf]
  %v964 = vld [vmem:[%s956 + $0x1c] sm:$0xf]
  %v965 = vld [vmem:[%s956 + $0x20] sm:$0xf]
  %v966 = vld [vmem:[%s956 + $0x24] sm:$0xf]
  %v967 = vld [vmem:[%s956 + $0x28] sm:$0xf]
  %v968 = vld [vmem:[%s956 + $0x2c] sm:$0xf]
  %v969 = vld [vmem:[%s956 + $0x30] sm:$0xf]
  %v970 = vld [vmem:[%s956 + $0x34] sm:$0xf]
  %v971 = vld [vmem:[%s956 + $0x38] sm:$0xf]
  %v972 = vld [vmem:[%s956 + $0x3c] sm:$0xf]
  %v973 = vunpack.c.l.bf16 %v957
  %v974 = vunpack.c.l.bf16 %v958
  %v975 = vunpack.c.l.bf16 %v959
  %v976 = vunpack.c.l.bf16 %v960
  %v977 = vunpack.c.l.bf16 %v961
  %v978 = vunpack.c.l.bf16 %v962
  %v979 = vunpack.c.l.bf16 %v963
  %v980 = vunpack.c.l.bf16 %v964
  %v981 = vunpack.c.l.bf16 %v965
  %v982 = vunpack.c.l.bf16 %v966
  %v983 = vunpack.c.l.bf16 %v967
  %v984 = vunpack.c.l.bf16 %v968
  %v985 = vunpack.c.l.bf16 %v969
  %v986 = vunpack.c.l.bf16 %v970
  %v987 = vunpack.c.l.bf16 %v971
  %v988 = vunpack.c.l.bf16 %v972
  %v989 = vld [vmem:[%s2 + $0x9] sm:$0x1]
  %v990 = vlaneseq
  %v991 = vshrl.u32 %v990, 7
  %v992 = vsub.s32 0, %v991
  %v993 = vrot.slane %v989, %v992
  %994 = vmatprep.subr.mxu0 0.0
  %995 = vmatpush1.msra.mxu0 %v988
  %996 = vmatprep.subr.mxu0 0.0
  %997 = vmatpush1.msra.mxu0 %v987
  %998 = vmatprep.subr.mxu0 0.0
  %999 = vmatpush1.msra.mxu0 %v986
  %1000 = vmatprep.subr.mxu0 0.0
  %1001 = vmatpush1.msra.mxu0 %v985
  %1002 = vmatprep.subr.mxu0 0.0
  %1003 = vmatpush1.msra.mxu0 %v984
  %1004 = vmatprep.subr.mxu0 0.0
  %1005 = vmatpush1.msra.mxu0 %v983
  %1006 = vmatprep.subr.mxu0 0.0
  %1007 = vmatpush1.msra.mxu0 %v982
  %1008 = vmatprep.subr.mxu0 0.0
  %1009 = vmatpush1.msra.mxu0 %v981
  %1010 = vmatprep.subr.mxu0 0.0
  %1011 = vmatpush1.msra.mxu0 %v980
  %1012 = vmatprep.subr.mxu0 0.0
  %1013 = vmatpush1.msra.mxu0 %v979
  %1014 = vmatprep.subr.mxu0 0.0
  %1015 = vmatpush1.msra.mxu0 %v978
  %1016 = vmatprep.subr.mxu0 0.0
  %1017 = vmatpush1.msra.mxu0 %v977
  %1018 = vmatprep.subr.mxu0 0.0
  %1019 = vmatpush1.msra.mxu0 %v976
  %1020 = vmatprep.subr.mxu0 0.0
  %1021 = vmatpush1.msra.mxu0 %v975
  %1022 = vmatprep.subr.mxu0 0.0
  %1023 = vmatpush1.msra.mxu0 %v974
  %1024 = vmatprep.subr.mxu0 0.0
  %1025 = vmatpush1.msra.mxu0 %v973
  %1026 = vmatprep.subr.mxu0 0.0
  %1027 = vmatpush2.msra.mxu0 0.0
  %1028 = vmatprep.subr.mxu0 0.0
  %1029 = vmatpush2.msra.mxu0 0.0
  %1030 = vmatprep.subr.mxu0 0.0
  %1031 = vmatpush2.msra.mxu0 0.0
  %1032 = vmatprep.subr.mxu0 0.0
  %1033 = vmatpush2.msra.mxu0 0.0
  %1034 = vmatprep.subr.mxu0 0.0
  %1035 = vmatpush2.msra.mxu0 0.0
  %1036 = vmatprep.subr.mxu0 0.0
  %1037 = vmatpush2.msra.mxu0 0.0
  %1038 = vmatprep.subr.mxu0 0.0
  %1039 = vmatpush2.msra.mxu0 0.0
  %1040 = vmatprep.subr.mxu0 0.0
  %1041 = vmatpush2.msra.mxu0 0.0
  %1042 = vmatprep.subr.mxu0 0.0
  %1043 = vmatpush2.msra.mxu0 0.0
  %1044 = vmatprep.subr.mxu0 0.0
  %1045 = vmatpush2.msra.mxu0 0.0
  %1046 = vmatprep.subr.mxu0 0.0
  %1047 = vmatpush2.msra.mxu0 0.0
  %1048 = vmatprep.subr.mxu0 0.0
  %1049 = vmatpush2.msra.mxu0 0.0
  %1050 = vmatprep.subr.mxu0 0.0
  %1051 = vmatpush2.msra.mxu0 0.0
  %1052 = vmatprep.subr.mxu0 0.0
  %1053 = vmatpush2.msra.mxu0 0.0
  %1054 = vmatprep.subr.mxu0 0.0
  %1055 = vmatpush2.msra.mxu0 0.0
  %1056 = vmatprep.subr.mxu0 0.0
  %1057 = vmatpush2.msra.mxu0 0.0
  %1058 = vmatprep.mubr.f32.mxu0 0.0
  %1059 = vmatmul.mubr.f32.gmra.mxu0 %v940
  %v1060 = vpop.f32.mrf.mxu0
  %v1061 = vadd.f32 %v993, %v1060
  %v1062 = vpop.f32.mrf.mxu0
  %1063 = vmatprep.mubr.f32.mxu0 0.0
  %1064 = vmatmul.mubr.f32.gmra.mxu0 %v941
  %v1065 = vpop.f32.mrf.mxu0
  %v1066 = vadd.f32 %v993, %v1065
  %v1067 = vpop.f32.mrf.mxu0
  %1068 = vmatprep.mubr.f32.mxu0 0.0
  %1069 = vmatmul.mubr.f32.gmra.mxu0 %v942
  %v1070 = vpop.f32.mrf.mxu0
  %v1071 = vadd.f32 %v993, %v1070
  %v1072 = vpop.f32.mrf.mxu0
  %1073 = vmatprep.mubr.f32.mxu0 0.0
  %1074 = vmatmul.mubr.f32.gmra.mxu0 %v943
  %v1075 = vpop.f32.mrf.mxu0
  %v1076 = vadd.f32 %v993, %v1075
  %v1077 = vpop.f32.mrf.mxu0
  %1078 = vmatprep.mubr.f32.mxu0 0.0
  %1079 = vmatmul.mubr.f32.gmra.mxu0 %v944
  %v1080 = vpop.f32.mrf.mxu0
  %v1081 = vadd.f32 %v993, %v1080
  %v1082 = vpop.f32.mrf.mxu0
  %1083 = vmatprep.mubr.f32.mxu0 0.0
  %1084 = vmatmul.mubr.f32.gmra.mxu0 %v945
  %v1085 = vpop.f32.mrf.mxu0
  %v1086 = vadd.f32 %v993, %v1085
  %v1087 = vpop.f32.mrf.mxu0
  %1088 = vmatprep.mubr.f32.mxu0 0.0
  %1089 = vmatmul.mubr.f32.gmra.mxu0 %v946
  %v1090 = vpop.f32.mrf.mxu0
  %v1091 = vadd.f32 %v993, %v1090
  %v1092 = vpop.f32.mrf.mxu0
  %1093 = vmatprep.mubr.f32.mxu0 0.0
  %1094 = vmatmul.mubr.f32.gmra.mxu0 %v947
  %v1095 = vpop.f32.mrf.mxu0
  %v1096 = vadd.f32 %v993, %v1095
  %v1097 = vpop.f32.mrf.mxu0
  %1098 = vmatprep.mubr.f32.mxu0 0.0
  %1099 = vmatmul.mubr.f32.gmra.mxu0 %v948
  %v1100 = vpop.f32.mrf.mxu0
  %v1101 = vadd.f32 %v993, %v1100
  %v1102 = vpop.f32.mrf.mxu0
  %1103 = vmatprep.mubr.f32.mxu0 0.0
  %1104 = vmatmul.mubr.f32.gmra.mxu0 %v949
  %v1105 = vpop.f32.mrf.mxu0
  %v1106 = vadd.f32 %v993, %v1105
  %v1107 = vpop.f32.mrf.mxu0
  %1108 = vmatprep.mubr.f32.mxu0 0.0
  %1109 = vmatmul.mubr.f32.gmra.mxu0 %v950
  %v1110 = vpop.f32.mrf.mxu0
  %v1111 = vadd.f32 %v993, %v1110
  %v1112 = vpop.f32.mrf.mxu0
  %1113 = vmatprep.mubr.f32.mxu0 0.0
  %1114 = vmatmul.mubr.f32.gmra.mxu0 %v951
  %v1115 = vpop.f32.mrf.mxu0
  %v1116 = vadd.f32 %v993, %v1115
  %v1117 = vpop.f32.mrf.mxu0
  %1118 = vmatprep.mubr.f32.mxu0 0.0
  %1119 = vmatmul.mubr.f32.gmra.mxu0 %v952
  %v1120 = vpop.f32.mrf.mxu0
  %v1121 = vadd.f32 %v993, %v1120
  %v1122 = vpop.f32.mrf.mxu0
  %1123 = vmatprep.mubr.f32.mxu0 0.0
  %1124 = vmatmul.mubr.f32.gmra.mxu0 %v953
  %v1125 = vpop.f32.mrf.mxu0
  %v1126 = vadd.f32 %v993, %v1125
  %v1127 = vpop.f32.mrf.mxu0
  %1128 = vmatprep.mubr.f32.mxu0 0.0
  %1129 = vmatmul.mubr.f32.gmra.mxu0 %v954
  %v1130 = vpop.f32.mrf.mxu0
  %v1131 = vadd.f32 %v993, %v1130
  %v1132 = vpop.f32.mrf.mxu0
  %1133 = vmatprep.mubr.f32.mxu0 0.0
  %1134 = vmatmul.mubr.f32.gmra.mxu0 %v955
  %v1135 = vpop.f32.mrf.mxu0
  %v1136 = vadd.f32 %v993, %v1135
  %v1137 = vpop.f32.mrf.mxu0
  %1138 = vdwg.mxu0
  %v1139 = vtanh.pop %v1061
  %v1140 = vtanh.pop %v1066
  %v1141 = vtanh.pop %v1071
  %v1142 = vtanh.pop %v1076
  %v1143 = vtanh.pop %v1081
  %v1144 = vtanh.pop %v1086
  %v1145 = vtanh.pop %v1091
  %v1146 = vtanh.pop %v1096
  %v1147 = vtanh.pop %v1101
  %v1148 = vtanh.pop %v1106
  %v1149 = vtanh.pop %v1111
  %v1150 = vtanh.pop %v1116
  %v1151 = vtanh.pop %v1121
  %v1152 = vtanh.pop %v1126
  %v1153 = vtanh.pop %v1131
  %v1154 = vtanh.pop %v1136
  %1155 = vst [vmem:[%s3] sm:$0xff] %v1139
  %1156 = vst [vmem:[%s3 + $0x8] sm:$0xff] %v1140
  %1157 = vst [vmem:[%s3 + $0x10] sm:$0xff] %v1141
  %1158 = vst [vmem:[%s3 + $0x18] sm:$0xff] %v1142
  %1159 = vst [vmem:[%s3 + $0x20] sm:$0xff] %v1143
  %1160 = vst [vmem:[%s3 + $0x28] sm:$0xff] %v1144
  %1161 = vst [vmem:[%s3 + $0x30] sm:$0xff] %v1145
  %1162 = vst [vmem:[%s3 + $0x38] sm:$0xff] %v1146
  %1163 = vst [vmem:[%s3 + $0x40] sm:$0xff] %v1147
  %1164 = vst [vmem:[%s3 + $0x48] sm:$0xff] %v1148
  %1165 = vst [vmem:[%s3 + $0x50] sm:$0xff] %v1149
  %1166 = vst [vmem:[%s3 + $0x58] sm:$0xff] %v1150
  %1167 = vst [vmem:[%s3 + $0x60] sm:$0xff] %v1151
  %1168 = vst [vmem:[%s3 + $0x68] sm:$0xff] %v1152
  %1169 = vst [vmem:[%s3 + $0x70] sm:$0xff] %v1153
  %1170 = vst [vmem:[%s3 + $0x78] sm:$0xff] %v1154
  // Predicated region
  $region14: #{_gnet_forward_jit.1} parent=0 // pred_check
    _
  $region15: #{_gnet_forward_jit.1} parent=0 // pred_check_branch
    %1172 = sbr.rel (0) target = $region17
  $region16: #{_gnet_forward_jit.1} parent=0 // pred_region
    _
  $region17: #{_gnet_forward_jit.1} parent=0 // pred_fallthru
    _
  // Predicated region
  $region18: #{_gnet_forward_jit.1} parent=0 // pred_check
    _
  $region19: #{_gnet_forward_jit.1} parent=0 // pred_check_branch
    %1174 = sbr.rel (0) target = $region21
  $region20: #{_gnet_forward_jit.1} parent=0 // pred_region
    _
  $region21: #{_gnet_forward_jit.1} parent=0 // pred_fallthru
    _

</llo_original>
